<compile_context>
chip_gen: v7x
topology: tpu7x:2x2x1
jax: 0.10.0
libtpu: 0.0.40
codegen_flags: <defaults>
</compile_context>

<pallas_src>
import numpy as np
import jax
import jax.numpy as jnp
from jax.experimental import pallas as pl
from jax.experimental.pallas import tpu as pltpu

_LANE = 128      # vreg lane width
_SUBLANE = 8     # vreg sublane count (f32)
_CHUNK = 2048    # in-kernel compute tile along the batch/lane axis


def _round_up(x, m):
    return (x + m - 1) // m * m


def _vmem_limit_bytes():
    """Per-generation scoped-VMEM budget: ~3/4 of physical, capped at 96 MiB."""
    phys = 64 << 20                      # conservative fallback (v7x physical)
    try:
        info = pltpu.get_tpu_info()
        phys = int(getattr(info, "vmem_capacity_bytes", phys))
    except Exception:
        pass
    return int(min(phys * 3 // 4, 96 << 20))


def _pick_batch_tile(batch, d, itemsize, vmem_limit):
    """Rows of x per grid step (= lane width of each output block)."""
    if batch <= _CHUNK:
        return batch                                     # single full-array block
    # ~4 MiB of x HBM traffic per step amortizes the ~0.35us per-step overhead.
    tb_hbm = (4 << 20) // max(1, d * itemsize)
    # VMEM per row: x double-buffered and lane-padded to 128 lanes, plus the (1, tb)
    # f32 output double-buffered and sublane-padded to 8 rows; reserve ~8 MiB for the
    # h chunks, weights and compiler slack.
    row_bytes = 2 * max(d, _LANE) * itemsize + 2 * _SUBLANE * 4
    tb_vmem = (vmem_limit - (8 << 20)) // row_bytes
    # >= 2 grid steps so both v7x TensorCores get work under "parallel" semantics.
    tb_split = _round_up(pl.cdiv(batch, 2), _CHUNK)
    tb = min(tb_hbm, tb_vmem, tb_split, _round_up(batch, _CHUNK), 16 * _CHUNK)
    return max(_CHUNK, tb // _CHUNK * _CHUNK)


def _normalize_batch_tile(tb, batch):
    """Clamp a user-provided batch tile to a BlockSpec-legal shape."""
    tb = max(1, int(tb))
    if tb >= batch:
        return batch                                     # single full-array block
    if tb <= _CHUNK:
        return max(_LANE, _round_up(tb, _LANE))          # output lane dim % 128 == 0
    return _round_up(tb, _CHUNK)


def _make_kernel(hp, n_pos_pad, chunk, n_chunks):
    """Kernel factory; hp / n_pos_pad / chunk / n_chunks are static Python ints."""

    def chunk_out(x_chunk, w1, b1, b2):
        # fc1 in transposed orientation: h^T = W1 @ x^T -> (hp, chunk); MXU, f32 acc.
        h = jax.lax.dot_general(
            w1, x_chunk,
            dimension_numbers=(((1,), (1,)), ((), ())),
            preferred_element_type=jnp.float32,
        )
        h = jnp.maximum(h + b1, 0.0)           # bias + ReLU (VPU); padded rows stay 0
        # fc2: |w2| is folded into W1/b1, so it is just a signed cross-sublane reduce.
        if n_pos_pad == 0:
            z = -jnp.sum(h, axis=0, keepdims=True)
        elif n_pos_pad == hp:
            z = jnp.sum(h, axis=0, keepdims=True)
        else:
            z = (jnp.sum(h[:n_pos_pad], axis=0, keepdims=True)
                 - jnp.sum(h[n_pos_pad:], axis=0, keepdims=True))
        return jax.nn.sigmoid(z + b2)          # EUP; (1, chunk), lane-dense

    def kernel(x_ref, w1_ref, b1_ref, b2_ref, o_ref):
        # x_ref : (tb, D)   activation tile streamed from HBM
        # w1_ref: (hp, D)   |w2|-scaled fc1 weight, sign-partitioned rows, VMEM-resident
        # b1_ref: (hp, 1)   |w2|-scaled fc1 bias, f32
        # b2_ref: (1, 1)    fc2 bias, SMEM scalar
        # o_ref : (1, tb)   lane-dense output row
        w1 = w1_ref[...]
        b1 = b1_ref[...]
        b2 = b2_ref[0, 0]
        # Short fixed trip count -> static unroll (offsets static, lane-aligned);
        # keeps the f32 h intermediate at (hp, chunk) regardless of tb.
        for c in range(n_chunks):
            col = c * chunk
            y = chunk_out(x_ref[col:col + chunk, :], w1, b1, b2)
            o_ref[:, col:col + chunk] = y.astype(o_ref.dtype)

    return kernel


def shallow_nn_forward(x, w1, b1, w2, b2, *, batch_tile=None, compute_dtype=None):
    """y = sigmoid(relu(x @ w1.T + b1) @ w2.T + b2), PyTorch-Linear parameter layout.

    x: (B, D), w1: (H, D), b1: (H,), w2: (1, H), b2: (1,).  Returns (B, 1) float32.
    compute_dtype defaults to x.dtype (stream bf16 only when x already arrives bf16 —
    a wrapper-side cast would cost an extra HBM pass).  Params must be concrete
    (not traced): the sign partition of w2 is resolved at trace time.
    """
    B, D = x.shape
    H = w1.shape[0]

    compute_dtype = jnp.dtype(x.dtype if compute_dtype is None else compute_dtype)
    xc = x if x.dtype == compute_dtype else x.astype(compute_dtype)

    # ---- one-time parameter prep (tiny tensors, outside the kernel) ----
    # Static sign partition of fc2: positive-or-zero rows first, negative rows after
    # an 8-row (sublane) aligned boundary; |w2| is folded into the fc1 rows
    # (relu(a * s) == s * relu(a) for s >= 0, and s == 0 rows contribute exactly 0).
    w2_np = np.asarray(jax.device_get(w2), dtype=np.float32).reshape(-1)
    assert w2_np.size == H, "w2 must have one weight per hidden unit"
    pos_idx = np.flatnonzero(w2_np >= 0.0)
    neg_idx = np.flatnonzero(w2_np < 0.0)
    n_pos, n_neg = int(pos_idx.size), int(neg_idx.size)
    n_pos_pad = _round_up(n_pos, _SUBLANE)
    hp = max(_SUBLANE, n_pos_pad + _round_up(n_neg, _SUBLANE))

    scale = jnp.abs(jnp.asarray(w2, jnp.float32).reshape(-1))        # (H,)
    w1_s = w1.astype(jnp.float32) * scale[:, None]
    b1_s = b1.astype(jnp.float32) * scale

    w1p = jnp.zeros((hp, D), compute_dtype)
    b1p = jnp.zeros((hp, 1), jnp.float32)
    if n_pos:
        w1p = w1p.at[:n_pos, :].set(w1_s[pos_idx].astype(compute_dtype))
        b1p = b1p.at[:n_pos, 0].set(b1_s[pos_idx])
    if n_neg:
        w1p = w1p.at[n_pos_pad:n_pos_pad + n_neg, :].set(
            w1_s[neg_idx].astype(compute_dtype))
        b1p = b1p.at[n_pos_pad:n_pos_pad + n_neg, 0].set(b1_s[neg_idx])
    b2p = jnp.asarray(b2, jnp.float32).reshape(1, 1)

    # ---- tiling ----
    vmem_limit = _vmem_limit_bytes()
    if batch_tile is None:
        tb = _pick_batch_tile(B, D, compute_dtype.itemsize, vmem_limit)
    else:
        tb = _normalize_batch_tile(batch_tile, B)
    if tb <= _CHUNK or tb % _CHUNK != 0:
        chunk, n_chunks = tb, 1
    else:
        chunk, n_chunks = _CHUNK, tb // _CHUNK

    grid = (pl.cdiv(B, tb),)          # ragged tail handled by boundary clipping
    kernel = _make_kernel(hp, n_pos_pad, chunk, n_chunks)

    out = pl.pallas_call(
        kernel,
        out_shape=jax.ShapeDtypeStruct((1, B), jnp.float32),
        grid_spec=pltpu.PrefetchScalarGridSpec(
            num_scalar_prefetch=0,
            grid=grid,
            in_specs=[
                pl.BlockSpec((tb, D), lambda i: (i, 0)),    # x tile, streamed over batch
                pl.BlockSpec((hp, D), lambda i: (0, 0)),    # scaled W1, VMEM-resident
                pl.BlockSpec((hp, 1), lambda i: (0, 0)),    # scaled b1
                pl.BlockSpec(memory_space=pltpu.MemorySpace.SMEM),  # b2 scalar
            ],
            out_specs=pl.BlockSpec((1, tb), lambda i: (0, i)),      # lane-dense row
        ),
        compiler_params=pltpu.CompilerParams(
            dimension_semantics=("parallel",),
            vmem_limit_bytes=vmem_limit,
        ),
    )(xc, w1p, b1p, b2p)

    return out[0][:, None]


if __name__ == "__main__":
    key = jax.random.PRNGKey(0)
    kx, k1, k2, k3, k4, kb = jax.random.split(key, 6)

    batch, input_size, hidden = 8, 32, 64
    bound1 = float(input_size) ** -0.5
    bound2 = float(hidden) ** -0.5

    x = jax.random.normal(kx, (batch, input_size), jnp.float32)
    w1 = jax.random.uniform(k1, (hidden, input_size), jnp.float32, -bound1, bound1)
    b1 = jax.random.uniform(k2, (hidden,), jnp.float32, -bound1, bound1)
    w2 = jax.random.uniform(k3, (1, hidden), jnp.float32, -bound2, bound2)
    b2 = jax.random.uniform(k4, (1,), jnp.float32, -bound2, bound2)

    def reference(xv, w2v=w2):
        h = jnp.maximum(xv @ w1.T + b1, 0.0)
        return jax.nn.sigmoid(h @ w2v.T + b2)

    # 1) small batch, f32, single full-array block (mixed-sign reduce branch).
    y = jax.block_until_ready(shallow_nn_forward(x, w1, b1, w2, b2))
    assert y.shape == (batch, 1)
    assert jnp.allclose(y, reference(x), atol=1e-5, rtol=1e-5)

    # 2) single-sign w2 exercises the all-positive / all-negative reduce branches.
    y_pos = shallow_nn_forward(x, w1, b1, jnp.abs(w2), b2)
    y_neg = shallow_nn_forward(x, w1, b1, -jnp.abs(w2), b2)
    assert jnp.allclose(y_pos, reference(x, jnp.abs(w2)), atol=1e-5, rtol=1e-5)
    assert jnp.allclose(y_neg, reference(x, -jnp.abs(w2)), atol=1e-5, rtol=1e-5)

    # 3) ragged batch, auto tile: multi-chunk body + clipped last grid step (no pad pass).
    big_batch = 5000
    xb = jax.random.normal(kb, (big_batch, input_size), jnp.float32)
    yb = jax.block_until_ready(shallow_nn_forward(xb, w1, b1, w2, b2))
    assert yb.shape == (big_batch, 1)
    assert jnp.allclose(yb, reference(xb), atol=1e-5, rtol=1e-5)

    # 4) bf16 streaming mode with x already bf16 upstream (no wrapper-side cast),
    #    explicit 2048-row tile -> 3 grid steps with a clipped tail.
    xb_bf16 = xb.astype(jnp.bfloat16)
    ybf = jax.block_until_ready(
        shallow_nn_forward(xb_bf16, w1, b1, w2, b2, batch_tile=2048))
    assert ybf.shape == (big_batch, 1)
    assert jnp.allclose(ybf, reference(xb), atol=2e-2, rtol=2e-2)

    print("KERNEL_OK")
</pallas_src>

<mosaic_0001>
module attributes {stable_mosaic.version = 11 : i64} {
  func.func @kernel(%arg0: i32, %arg1: memref<8x32xf32, #tpu.memory_space<vmem>>, %arg2: memref<72x32xf32, #tpu.memory_space<vmem>>, %arg3: memref<72x1xf32, #tpu.memory_space<vmem>>, %arg4: memref<1x1xf32, #tpu.memory_space<smem>>, %arg5: memref<1x8xf32, #tpu.memory_space<vmem>>) attributes {dimension_semantics = [#tpu.dimension_semantics<parallel>], iteration_bounds = array<i64: 1>, scalar_prefetch = 0 : i64, scratch_operands = 0 : i64, tpu.core_type = #tpu.core_type<tc>, window_params = [{transform_indices = @transform_0, window_bounds = array<i64: 8, 32>}, {pipeline_mode = #tpu.pipeline_mode<synchronous>, transform_indices = @transform_1, window_bounds = array<i64: 72, 32>}, {pipeline_mode = #tpu.pipeline_mode<synchronous>, transform_indices = @transform_2, window_bounds = array<i64: 72, 1>}, {transform_indices = @transform_3, window_bounds = array<i64: 1, 1>}, {transform_indices = @transform_4, window_bounds = array<i64: 1, 8>}]} {
    %c0 = arith.constant 0 : index
    %c0_0 = arith.constant 0 : index
    %0 = vector.load %arg2[%c0, %c0_0] : memref<72x32xf32, #tpu.memory_space<vmem>>, vector<72x32xf32>
    %c0_1 = arith.constant 0 : index
    %c0_2 = arith.constant 0 : index
    %1 = vector.load %arg3[%c0_1, %c0_2] : memref<72x1xf32, #tpu.memory_space<vmem>>, vector<72x1xf32>
    %c0_3 = arith.constant 0 : index
    %c0_4 = arith.constant 0 : index
    %2 = memref.load %arg4[%c0_3, %c0_4] : memref<1x1xf32, #tpu.memory_space<smem>>
    %c0_5 = arith.constant 0 : index
    %c0_6 = arith.constant 0 : index
    %3 = vector.load %arg1[%c0_5, %c0_6] : memref<8x32xf32, #tpu.memory_space<vmem>>, vector<8x32xf32>
    %cst = arith.constant dense<0.000000e+00> : vector<72x8xf32>
    %4 = tpu.matmul %0, %3, %cst {dimension_numbers = #tpu.dot_dimension_numbers<[1], [1], [0], [0], [0, 0, 1, 0], [], []>} : vector<72x32xf32>, vector<8x32xf32>, vector<72x8xf32> -> vector<72x8xf32>
    %5 = vector.broadcast %1 : vector<72x1xf32> to vector<72x8xf32>
    %6 = arith.addf %4, %5 : vector<72x8xf32>
    %cst_7 = arith.constant 0.000000e+00 : f32
    %7 = vector.broadcast %cst_7 : f32 to vector<72x8xf32>
    %8 = arith.maximumf %6, %7 : vector<72x8xf32>
    %9 = vector.extract_strided_slice %8 {offsets = [0, 0], sizes = [40, 8], strides = [1, 1]} : vector<72x8xf32> to vector<40x8xf32>
    %cst_8 = arith.constant dense<0.000000e+00> : vector<8xf32>
    %10 = vector.multi_reduction <add>, %9, %cst_8 [0] : vector<40x8xf32> to vector<8xf32>
    %11 = vector.shape_cast %10 : vector<8xf32> to vector<1x8xf32>
    %12 = vector.extract_strided_slice %8 {offsets = [40, 0], sizes = [32, 8], strides = [1, 1]} : vector<72x8xf32> to vector<32x8xf32>
    %cst_9 = arith.constant dense<0.000000e+00> : vector<8xf32>
    %13 = vector.multi_reduction <add>, %12, %cst_9 [0] : vector<32x8xf32> to vector<8xf32>
    %14 = vector.shape_cast %13 : vector<8xf32> to vector<1x8xf32>
    %15 = arith.subf %11, %14 : vector<1x8xf32>
    %16 = vector.broadcast %2 : f32 to vector<1x8xf32>
    %17 = arith.addf %15, %16 : vector<1x8xf32>
    %18 = arith.negf %17 : vector<1x8xf32>
    %19 = math.exp %18 : vector<1x8xf32>
    %cst_10 = arith.constant 1.000000e+00 : f32
    %20 = vector.broadcast %cst_10 : f32 to vector<1x8xf32>
    %21 = arith.addf %20, %19 : vector<1x8xf32>
    %22 = arith.divf %20, %21 : vector<1x8xf32>
    %c0_11 = arith.constant 0 : index
    %c0_12 = arith.constant 0 : index
    %23 = vector.load %arg5[%c0_11, %c0_12] : memref<1x8xf32, #tpu.memory_space<vmem>>, vector<1x8xf32>
    tpu.vector_store %arg5[%c0_11, %c0_12], %22 {strides = array<i32>} : memref<1x8xf32, #tpu.memory_space<vmem>>, vector<1x8xf32>,
    return
  }
  func.func @transform_0(%arg0: i32) -> (i32, i32) {
    %c0_i32 = arith.constant 0 : i32
    %c0_i32_0 = arith.constant 0 : i32
    return %arg0, %c0_i32 : i32, i32
  }
  func.func @transform_1(%arg0: i32) -> (i32, i32) {
    %c0_i32 = arith.constant 0 : i32
    %c0_i32_0 = arith.constant 0 : i32
    %c0_i32_1 = arith.constant 0 : i32
    return %c0_i32, %c0_i32_0 : i32, i32
  }
  func.func @transform_2(%arg0: i32) -> (i32, i32) {
    %c0_i32 = arith.constant 0 : i32
    %c0_i32_0 = arith.constant 0 : i32
    %c0_i32_1 = arith.constant 0 : i32
    return %c0_i32, %c0_i32_0 : i32, i32
  }
  func.func @transform_3(%arg0: i32) -> (i32, i32) {
    %c0_i32 = arith.constant 0 : i32
    %c0_i32_0 = arith.constant 0 : i32
    %c0_i32_1 = arith.constant 0 : i32
    return %c0_i32, %c0_i32_0 : i32, i32
  }
  func.func @transform_4(%arg0: i32) -> (i32, i32) {
    %c0_i32 = arith.constant 0 : i32
    %c0_i32_0 = arith.constant 0 : i32
    return %c0_i32, %arg0 : i32, i32
  }
}

</mosaic_0001>

<llo_original>
// kernel: tpu_custom_call.1
$region0: #{tpu_custom_call.1}
  #allocation0 [shape = 'u32[]', space=smem, size = 0x4, offset = 0x4, fixed_abs, tag = 'smem constant byte address 0x4 - core index']
  #allocation1 [shape = 'u32[144,128]{1,0:T(1,128)}', space=vmem, size = 0x12000, scoped, tag = 'internal scratch']
  #allocation2 [shape = 'f32[1,1]{1,0:T(1,128)S(6)}', space=smem, size = 0x200, scoped, tag = 'scoped memory for tpu_custom_call.1']
  %s0 = inlined_call_operand.vmem [shape: f32[8,32], index: 0, kind: input, shape index: {}]
  %s1 = inlined_call_operand.vmem [shape: f32[72,32], index: 1, kind: input, shape index: {}]
  %s2 = inlined_call_operand.vmem [shape: f32[72,1], index: 2, kind: input, shape index: {}]
  %s3 = inlined_call_operand.<no memory space> [shape: f32[1,1], index: 3, kind: input, shape index: {}]
  %s4 = inlined_call_operand.hbm [shape: f32[1,8], index: 4, kind: output, shape index: {}]
  %s5 = sld [smem:[#allocation0]]
  $region26: #{tpu_custom_call.1} parent=0
    _
  %s7 = ssub.s32 1, %s5
  %s8 = scalar_select 0, %s7, %s5
  %9 = sst [smem:[#allocation2]] %s3
  $region1: #{tpu_custom_call.1} parent=0
    #allocation3 [shape = 'u8[512]{0}', space=vmem, size = 0x400, scoped, tag = 'output window, operand 0, single buffered']
    #allocation4 [shape = 's32[1]{0}', space=sflag, size = 0x4, scoped, tag = 'scoped memory for tpu_custom_call.1']
    %10 = vsyncpa [#allocation4], 0
    // Predicated region
    $region2: #{tpu_custom_call.1} parent=1 // pred_check
      _
    $region3: #{tpu_custom_call.1} parent=1 // pred_check_branch
      %12 = sbr.rel (0) target = $region5
    $region4: #{tpu_custom_call.1} parent=1 // pred_region
      _
    $region5: #{tpu_custom_call.1} parent=1 // pred_fallthru
      _
    // Predicated region
    $region6: #{tpu_custom_call.1} parent=1 // pred_check
      _
    $region7: #{tpu_custom_call.1} parent=1 // pred_check_branch
      %14 = sbr.rel (0) target = $region9
    $region8: #{tpu_custom_call.1} parent=1 // pred_region
      _
    $region9: #{tpu_custom_call.1} parent=1 // pred_fallthru
      _
    // Predicated region
    $region10: #{tpu_custom_call.1} parent=1 // pred_check
      _
    $region11: #{tpu_custom_call.1} parent=1 // pred_check_branch
      %16 = sbr.rel (0) target = $region13
    $region12: #{tpu_custom_call.1} parent=1 // pred_region
      _
    $region13: #{tpu_custom_call.1} parent=1 // pred_fallthru
      _
    // Predicated region
    $region14: #{tpu_custom_call.1} parent=1 // pred_check
      _
    $region15: #{tpu_custom_call.1} parent=1 // pred_check_branch
      %18 = sbr.rel (0) target = $region17
    $region16: #{tpu_custom_call.1} parent=1 // pred_region
      _
    $region17: #{tpu_custom_call.1} parent=1 // pred_fallthru
      _
    %v19 = vld [vmem:[%s1] sm:$0xff]
    %v20 = vld [vmem:[%s1 + $0x8] sm:$0xff]
    %v21 = vld [vmem:[%s1 + $0x10] sm:$0xff]
    %v22 = vld [vmem:[%s1 + $0x18] sm:$0xff]
    %v23 = vld [vmem:[%s1 + $0x20] sm:$0xff]
    %v24 = vld [vmem:[%s1 + $0x28] sm:$0xff]
    %v25 = vld [vmem:[%s1 + $0x30] sm:$0xff]
    %v26 = vld [vmem:[%s1 + $0x38] sm:$0xff]
    %v27 = vld [vmem:[%s1 + $0x40] sm:$0xff]
    %v28 = vld [vmem:[%s2] sm:$0xff]
    %v29 = vld [vmem:[%s2 + $0x8] sm:$0xff]
    %v30 = vld [vmem:[%s2 + $0x10] sm:$0xff]
    %v31 = vld [vmem:[%s2 + $0x18] sm:$0xff]
    %v32 = vld [vmem:[%s2 + $0x20] sm:$0xff]
    %v33 = vld [vmem:[%s2 + $0x28] sm:$0xff]
    %v34 = vld [vmem:[%s2 + $0x30] sm:$0xff]
    %v35 = vld [vmem:[%s2 + $0x38] sm:$0xff]
    %v36 = vld [vmem:[%s2 + $0x40] sm:$0xff]
    %s37 = sld [smem:[#allocation2]]
    %v38 = vld [vmem:[%s0] sm:$0xff]
    %40 = vset.pattern.permute.xlu0 0
    %41 = vperm.xlu0 %40, %v28
    %v42 = vpop.permute.xlu0 %41
    %45 = vset.pattern.permute.xlu0 0
    %46 = vperm.xlu0 %45, %v29
    %v47 = vpop.permute.xlu0 %46
    %50 = vset.pattern.permute.xlu0 0
    %51 = vperm.xlu0 %50, %v30
    %v52 = vpop.permute.xlu0 %51
    %55 = vset.pattern.permute.xlu0 0
    %56 = vperm.xlu0 %55, %v31
    %v57 = vpop.permute.xlu0 %56
    %60 = vset.pattern.permute.xlu0 0
    %61 = vperm.xlu0 %60, %v32
    %v62 = vpop.permute.xlu0 %61
    %65 = vset.pattern.permute.xlu0 0
    %66 = vperm.xlu0 %65, %v33
    %v67 = vpop.permute.xlu0 %66
    %70 = vset.pattern.permute.xlu0 0
    %71 = vperm.xlu0 %70, %v34
    %v72 = vpop.permute.xlu0 %71
    %75 = vset.pattern.permute.xlu0 0
    %76 = vperm.xlu0 %75, %v35
    %v77 = vpop.permute.xlu0 %76
    %80 = vset.pattern.permute.xlu0 0
    %81 = vperm.xlu0 %80, %v36
    %v82 = vpop.permute.xlu0 %81
    %vm84 = vcmask 261120
    %v86 = vsel %vm84, %v19, 0
    %v89 = vsel %vm84, %v20, 0
    %v92 = vsel %vm84, %v21, 0
    %v95 = vsel %vm84, %v22, 0
    %v98 = vsel %vm84, %v23, 0
    %v101 = vsel %vm84, %v24, 0
    %v104 = vsel %vm84, %v25, 0
    %v107 = vsel %vm84, %v26, 0
    %v110 = vsel %vm84, %v27, 0
    %v113 = vsel %vm84, %v38, 0
    %115 = vmatprep.subr.mxu0 0.0
    %116 = vmatpush1.xpose.msra.mxu0 %v113
    %117 = vmatprep.subr.mxu0 0.0
    %118 = vmatpush1.xpose.msra.mxu0 0.0
    %119 = vmatprep.subr.mxu0 0.0
    %120 = vmatpush1.xpose.msra.mxu0 0.0
    %121 = vmatprep.subr.mxu0 0.0
    %122 = vmatpush1.xpose.msra.mxu0 0.0
    %123 = vmatprep.subr.mxu0 0.0
    %124 = vmatpush1.xpose.msra.mxu0 0.0
    %125 = vmatprep.subr.mxu0 0.0
    %126 = vmatpush1.xpose.msra.mxu0 0.0
    %127 = vmatprep.subr.mxu0 0.0
    %128 = vmatpush1.xpose.msra.mxu0 0.0
    %129 = vmatprep.subr.mxu0 0.0
    %130 = vmatpush1.xpose.msra.mxu0 0.0
    %131 = vmatprep.subr.mxu0 0.0
    %132 = vmatpush1.xpose.msra.mxu0 0.0
    %133 = vmatprep.subr.mxu0 0.0
    %134 = vmatpush1.xpose.msra.mxu0 0.0
    %135 = vmatprep.subr.mxu0 0.0
    %136 = vmatpush1.xpose.msra.mxu0 0.0
    %137 = vmatprep.subr.mxu0 0.0
    %138 = vmatpush1.xpose.msra.mxu0 0.0
    %139 = vmatprep.subr.mxu0 0.0
    %140 = vmatpush1.xpose.msra.mxu0 0.0
    %141 = vmatprep.subr.mxu0 0.0
    %142 = vmatpush1.xpose.msra.mxu0 0.0
    %143 = vmatprep.subr.mxu0 0.0
    %144 = vmatpush1.xpose.msra.mxu0 0.0
    %145 = vmatprep.subr.mxu0 0.0
    %146 = vmatpush1.xpose.msra.mxu0 0.0
    %147 = vmatprep.subr.mxu0 0.0
    %148 = vmatpush1.xpose.msra.mxu0 0.0
    %149 = vmatprep.subr.mxu0 0.0
    %150 = vmatpush1.xpose.msra.mxu0 0.0
    %151 = vmatprep.subr.mxu0 0.0
    %152 = vmatpush1.xpose.msra.mxu0 0.0
    %153 = vmatprep.subr.mxu0 0.0
    %154 = vmatpush1.xpose.msra.mxu0 0.0
    %155 = vmatprep.subr.mxu0 0.0
    %156 = vmatpush1.xpose.msra.mxu0 0.0
    %157 = vmatprep.subr.mxu0 0.0
    %158 = vmatpush1.xpose.msra.mxu0 0.0
    %159 = vmatprep.subr.mxu0 0.0
    %160 = vmatpush1.xpose.msra.mxu0 0.0
    %161 = vmatprep.subr.mxu0 0.0
    %162 = vmatpush1.xpose.msra.mxu0 0.0
    %163 = vmatprep.subr.mxu0 0.0
    %164 = vmatpush1.xpose.msra.mxu0 0.0
    %165 = vmatprep.subr.mxu0 0.0
    %166 = vmatpush1.xpose.msra.mxu0 0.0
    %167 = vmatprep.subr.mxu0 0.0
    %168 = vmatpush1.xpose.msra.mxu0 0.0
    %169 = vmatprep.subr.mxu0 0.0
    %170 = vmatpush1.xpose.msra.mxu0 0.0
    %171 = vmatprep.subr.mxu0 0.0
    %172 = vmatpush1.xpose.msra.mxu0 0.0
    %173 = vmatprep.subr.mxu0 0.0
    %174 = vmatpush1.xpose.msra.mxu0 0.0
    %175 = vmatprep.subr.mxu0 0.0
    %176 = vmatpush1.xpose.msra.mxu0 0.0
    %177 = vmatprep.subr.mxu0 0.0
    %178 = vmatpush1.xpose.msra.mxu0 0.0
    %179 = vmatprep.mubr.f32.mxu0 0.0
    %180 = vmatmul.mubr.f32.gmra.mrb[0].mxu0 %v86
    %v181 = vpop.f32.mrb[0].mxu0
    %v182 = vadd.f32 %v42, %v181
    %v183 = vpop.f32.mrb[0].mxu0
    %184 = vmatprep.mubr.f32.mxu0 0.0
    %185 = vmatmul.mubr.f32.gmra.mrb[0].mxu0 %v89
    %v186 = vpop.f32.mrb[0].mxu0
    %v187 = vadd.f32 %v47, %v186
    %v188 = vpop.f32.mrb[0].mxu0
    %189 = vmatprep.mubr.f32.mxu0 0.0
    %190 = vmatmul.mubr.f32.gmra.mrb[0].mxu0 %v92
    %v191 = vpop.f32.mrb[0].mxu0
    %v192 = vadd.f32 %v52, %v191
    %v193 = vpop.f32.mrb[0].mxu0
    %194 = vmatprep.mubr.f32.mxu0 0.0
    %195 = vmatmul.mubr.f32.gmra.mrb[0].mxu0 %v95
    %v196 = vpop.f32.mrb[0].mxu0
    %v197 = vadd.f32 %v57, %v196
    %v198 = vpop.f32.mrb[0].mxu0
    %199 = vmatprep.mubr.f32.mxu0 0.0
    %200 = vmatmul.mubr.f32.gmra.mrb[0].mxu0 %v98
    %v201 = vpop.f32.mrb[0].mxu0
    %v202 = vadd.f32 %v62, %v201
    %v203 = vpop.f32.mrb[0].mxu0
    %204 = vmatprep.mubr.f32.mxu0 0.0
    %205 = vmatmul.mubr.f32.gmra.mrb[0].mxu0 %v101
    %v206 = vpop.f32.mrb[0].mxu0
    %v207 = vadd.f32 %v67, %v206
    %v208 = vpop.f32.mrb[0].mxu0
    %209 = vmatprep.mubr.f32.mxu0 0.0
    %210 = vmatmul.mubr.f32.gmra.mrb[0].mxu0 %v104
    %v211 = vpop.f32.mrb[0].mxu0
    %v212 = vadd.f32 %v72, %v211
    %v213 = vpop.f32.mrb[0].mxu0
    %214 = vmatprep.mubr.f32.mxu0 0.0
    %215 = vmatmul.mubr.f32.gmra.mrb[0].mxu0 %v107
    %v216 = vpop.f32.mrb[0].mxu0
    %v217 = vadd.f32 %v77, %v216
    %v218 = vpop.f32.mrb[0].mxu0
    %219 = vmatprep.mubr.f32.mxu0 0.0
    %220 = vmatmul.mubr.f32.gmra.mrb[0].mxu0 %v110
    %v221 = vpop.f32.mrb[0].mxu0
    %v222 = vadd.f32 %v82, %v221
    %v223 = vpop.f32.mrb[0].mxu0
    %224 = vdwg.mxu0
    %v225 = vmax.f32 %v182, 0.0
    %v226 = vmax.f32 %v187, 0.0
    %v227 = vmax.f32 %v192, 0.0
    %v228 = vmax.f32 %v197, 0.0
    %v229 = vmax.f32 %v202, 0.0
    %v230 = vmax.f32 %v207, 0.0
    %v231 = vmax.f32 %v212, 0.0
    %v232 = vmax.f32 %v217, 0.0
    %v233 = vmax.f32 %v222, 0.0
    %vm234 = vcmask 64512
    %v235 = vsel %vm234, %v225, 0.0
    %v236 = vsel %vm234, %v226, 0.0
    %v237 = vadd.f32 %v235, %v236
    %v238 = vsel %vm234, %v227, 0.0
    %v239 = vadd.f32 %v237, %v238
    %v240 = vsel %vm234, %v228, 0.0
    %v241 = vadd.f32 %v239, %v240
    %v242 = vsel %vm234, %v229, 0.0
    %v243 = vadd.f32 %v241, %v242
    %v244 = vrot.slane %v243, 4
    %v245 = vadd.f32 %v243, %v244
    %v246 = vrot.slane %v245, 2
    %v247 = vadd.f32 %v245, %v246
    %v248 = vrot.slane %v247, 1
    %v249 = vadd.f32 %v247, %v248
    %v250 = vsel %vm234, %v230, 0.0
    %v251 = vsel %vm234, %v231, 0.0
    %v252 = vadd.f32 %v250, %v251
    %v253 = vsel %vm234, %v232, 0.0
    %v254 = vadd.f32 %v252, %v253
    %v255 = vsel %vm234, %v233, 0.0
    %v256 = vadd.f32 %v254, %v255
    %v257 = vrot.slane %v256, 4
    %v258 = vadd.f32 %v256, %v257
    %v259 = vrot.slane %v258, 2
    %v260 = vadd.f32 %v258, %v259
    %v261 = vrot.slane %v260, 1
    %v262 = vadd.f32 %v260, %v261
    %v263 = vsub.f32 %v249, %v262
    %v264 = vstv %s37
    %v265 = vadd.f32 %v263, %v264
    %v266 = vxor.u32 %v265, 2147483648
    %v267 = vmul.f32 %v266, 1.442695
    %v268 = vpow.pop %v267
    %v269 = vadd.f32 %v268, 1.0
    %v270 = vrcp.pop %v269
    %v271 = vmul.f32 1.0, %v270
    %vm272 = vcmask 57344
    %273 = vst.msk [vmem:[#allocation3] sm:$0x1] %vm272, %v271
    // Predicated region
    $region18: #{tpu_custom_call.1} parent=1 // pred_check
      _
    $region19: #{tpu_custom_call.1} parent=1 // pred_check_branch
      %275 = sbr.rel (0) target = $region21
    $region20: #{tpu_custom_call.1} parent=1 // pred_region
      %s277 = ssub.s32 16, 16
      %278 = vsyncadd [#allocation4], %s277
      %s280 = sshll.u32 [#allocation3], 4
      %s281 = int_to_ptr.vmem [resolvable:$true] %s280
      %283 = dma.vmem_to_hbm [thread:$0]  %s281, 16, %s4, [#allocation4]
    $region21: #{tpu_custom_call.1} parent=1 // pred_fallthru
      _
    // Predicated region
    $region22: #{tpu_custom_call.1} parent=1 // pred_check
      _
    $region23: #{tpu_custom_call.1} parent=1 // pred_check_branch
      %285 = sbr.rel (0) target = $region25
    $region24: #{tpu_custom_call.1} parent=1 // pred_region
      %286 = dma.done [#allocation4], 16
    $region25: #{tpu_custom_call.1} parent=1 // pred_fallthru
      _
    %287 = vsyncpa [#allocation4], 1

</llo_original>
